<compile_context>
chip_gen: v7x
topology: tpu7x:2x2x1
jax: 0.10.0
libtpu: 0.0.40
codegen_flags: <defaults>
</compile_context>

<pallas_src>
import functools
import math

import jax
import jax.numpy as jnp
from jax.experimental import pallas as pl
from jax.experimental.pallas import tpu as pltpu


_DTYPES = {
    "float32": (jnp.float32, 4),
    "bfloat16": (jnp.bfloat16, 2),
    "float16": (jnp.float16, 2),
}

# Flipped to False (once, process-wide) if this Pallas build rejects
# pipeline_mode=pl.Buffered(1) on the resident weight BlockSpecs.
_BUFFERED_ONE_OK = True


def _to_dtype(name):
    return _DTYPES.get(name, (jnp.float32, 4))[0]


def _itemsize(name):
    return _DTYPES.get(name, (jnp.float32, 4))[1]


def _round_up(v, m):
    return (v + m - 1) // m * m


def _gelu_tanh(x):
    # GELU, tanh approximation -- matches torch.nn.GELU(approximate='tanh').
    c = math.sqrt(2.0 / math.pi)
    return 0.5 * x * (1.0 + jnp.tanh(c * (x + 0.044715 * x * x * x)))


@functools.lru_cache(maxsize=1)
def _tpu_config():
    """Returns (vmem_capacity_bytes_per_core, is_v5e, is_v7x), with fallbacks."""
    kind = ""
    try:
        kind = jax.devices()[0].device_kind.lower()
    except Exception:
        pass
    is_v5e = ("v5 lite" in kind) or ("v5e" in kind) or ("v5litepod" in kind)
    is_v7x = "v7" in kind
    try:
        vmem_cap = int(pltpu.get_tpu_info().vmem_capacity_bytes)
    except Exception:
        vmem_cap = (64 << 20) if is_v7x else (128 << 20)
    return vmem_cap, is_v5e, is_v7x


def _vmem_estimate(C, TH, TM, n_h_steps, out_itemsize, gelu_itemsize,
                   single_buffer_weights):
    """Per-TensorCore VMEM footprint, counting real pipeline buffer counts."""
    nb_w = 1 if (n_h_steps == 1 and single_buffer_weights) else 2
    nb_b2 = 1 if single_buffer_weights else 2
    return (
        nb_w * 2 * C * TH * 2                    # W1 + W2 chunks (bf16)
        + nb_w * TH * 4 + nb_b2 * C * 4          # b1 chunk + b2 (f32)
        + 2 * TM * C * 2                         # x tiles, double-buffered bf16
        + 2 * TM * C * out_itemsize              # out tiles, double-buffered
        + (TM * C * 4 if n_h_steps > 1 else 0)   # f32 accumulator scratch
        + TM * TH * (4 + gelu_itemsize)          # live hidden: f32 dot + GELU copy
        + (8 << 20)                              # spill / compiler-internal headroom
    )


def _choose_th(C, H, TM, budget, out_itemsize, gelu_itemsize, single_buffer_ok):
    """Largest hidden chunk TH (H itself, else a 128-multiple divisor) that fits."""
    candidates = [H]
    for t in (2048, 1024, 512, 256, 128):
        if t < H and H % t == 0:
            candidates.append(t)
    for th in candidates:
        n_h = H // th
        est = _vmem_estimate(C, th, TM, n_h, out_itemsize, gelu_itemsize,
                             single_buffer_weights=(n_h == 1 and single_buffer_ok))
        if est <= budget:
            return th, n_h
    th = candidates[-1]
    return th, H // th


# ---------------------------------------------------------------------------
# Kernel
# ---------------------------------------------------------------------------
def _make_mlp_kernel(n_h_steps, gelu_dtype):
    """Per grid step (i, j):
         h_j  = GELU(x_i @ W1[:, j*TH:(j+1)*TH] + b1[j])     # (TM, TH)
         acc += h_j @ W2[j*TH:(j+1)*TH, :]                   # (TM, C) f32
       and on the last j the accumulator (+ b2) is written to the output tile.
       With a single H chunk the accumulator scratch is skipped entirely.
    """
    if n_h_steps == 1:
        def kernel(x_ref, w1_ref, b1_ref, w2_ref, b2_ref, o_ref):
            h = jnp.dot(x_ref[...], w1_ref[...],
                        preferred_element_type=jnp.float32)
            h = (h + b1_ref[...]).astype(gelu_dtype)   # bias in f32, then epilogue dtype
            h = _gelu_tanh(h).astype(w2_ref.dtype)     # bf16 into the second MXU pass
            y = jnp.dot(h, w2_ref[...], preferred_element_type=jnp.float32)
            o_ref[...] = (y + b2_ref[...]).astype(o_ref.dtype)
        return kernel

    def kernel(x_ref, w1_ref, b1_ref, w2_ref, b2_ref, o_ref, acc_ref):
        j = pl.program_id(1)

        @pl.when(j == 0)
        def _():
            acc_ref[...] = jnp.zeros_like(acc_ref)

        h = jnp.dot(x_ref[...], w1_ref[...], preferred_element_type=jnp.float32)
        h = (h + b1_ref[...]).astype(gelu_dtype)
        h = _gelu_tanh(h).astype(w2_ref.dtype)
        acc_ref[...] += jnp.dot(h, w2_ref[...], preferred_element_type=jnp.float32)

        @pl.when(j == n_h_steps - 1)
        def _():
            o_ref[...] = (acc_ref[...] + b2_ref[...]).astype(o_ref.dtype)

    return kernel


def _spec(shape, index_map, mode):
    if mode is None:
        return pl.BlockSpec(shape, index_map)
    return pl.BlockSpec(shape, index_map, pipeline_mode=mode)


def _build_specs(TM, TH, C, n_h_steps, single_buffer_weights):
    resident = pl.Buffered(1) if single_buffer_weights else None
    # Weight/bias chunks only have a constant index map when there is a single
    # H chunk; otherwise they stream over j and want default double buffering.
    w_mode = resident if n_h_steps == 1 else None
    in_specs = [
        _spec((TM, C), lambda i, j: (i, 0), None),       # x: tiled over M
        _spec((C, TH), lambda i, j: (0, j), w_mode),     # W1 chunk
        _spec((1, TH), lambda i, j: (0, j), w_mode),     # b1 chunk
        _spec((TH, C), lambda i, j: (j, 0), w_mode),     # W2 chunk
        _spec((1, C), lambda i, j: (0, 0), resident),    # b2: always resident
    ]
    out_spec = pl.BlockSpec((TM, C), lambda i, j: (i, 0))
    return in_specs, out_spec


@functools.partial(
    jax.jit,
    static_argnames=("tm", "th", "out_dtype", "gelu_dtype",
                     "single_buffer_weights", "vmem_limit"),
)
def _mlp_pallas(x2d, w1_t, b1_2d, w2_t, b2_2d, *, tm, th, out_dtype, gelu_dtype,
                single_buffer_weights, vmem_limit):
    M, C = x2d.shape
    H = w1_t.shape[1]
    TM, TH = tm, th
    n_h_steps = H // TH
    M_pad = _round_up(M, TM)
    n_m_tiles = M_pad // TM

    x_pad = x2d
    if M_pad != M:
        x_pad = jnp.pad(x2d, ((0, M_pad - M), (0, 0)))
    x_pad = x_pad.astype(jnp.bfloat16)          # MXU-native activation dtype

    kernel = _make_mlp_kernel(n_h_steps, _to_dtype(gelu_dtype))
    in_specs, out_spec = _build_specs(TM, TH, C, n_h_steps, single_buffer_weights)
    scratch_shapes = [] if n_h_steps == 1 else [pltpu.VMEM((TM, C), jnp.float32)]

    out = pl.pallas_call(
        kernel,
        out_shape=jax.ShapeDtypeStruct((M_pad, C), _to_dtype(out_dtype)),
        grid_spec=pltpu.PrefetchScalarGridSpec(
            num_scalar_prefetch=0,
            grid=(n_m_tiles, n_h_steps),
            in_specs=in_specs,
            out_specs=out_spec,
            scratch_shapes=scratch_shapes,
        ),
        compiler_params=pltpu.CompilerParams(
            # M axis "parallel" -> megacore sharding across the 2 TCs on v7x;
            # H axis is the accumulation axis -> "arbitrary".
            dimension_semantics=("parallel", "arbitrary"),
            vmem_limit_bytes=int(vmem_limit),
        ),
    )(x_pad, w1_t, b1_2d, w2_t, b2_2d)

    return out[:M]


# ---------------------------------------------------------------------------
# Public wrappers
# ---------------------------------------------------------------------------
def prepare_mlp_params(w1, b1, w2, b2):
    """One-time weight prep (transpose + bf16 cast), done OUTSIDE the step.

    Torch nn.Linear layout: w1 (4C, C), b1 (4C,), w2 (C, 4C), b2 (C,).
    Returns (w1_t (C,4C) bf16, b1 (1,4C) f32, w2_t (4C,C) bf16, b2 (1,C) f32).
    """
    H, C = w1.shape
    w1_t = jnp.asarray(w1).T.astype(jnp.bfloat16)
    w2_t = jnp.asarray(w2).T.astype(jnp.bfloat16)
    b1_2d = jnp.asarray(b1).reshape(1, H).astype(jnp.float32)
    b2_2d = jnp.asarray(b2).reshape(1, C).astype(jnp.float32)
    return w1_t, b1_2d, w2_t, b2_2d


def mlp_forward(x, w1_t, b1_2d, w2_t, b2_2d, *, out_dtype=None, tm=None):
    """x: [B, T, C]; weights as returned by prepare_mlp_params."""
    global _BUFFERED_ONE_OK
    B, T, C = x.shape
    H = w1_t.shape[1]
    M = B * T

    if out_dtype is None:
        out_name = x.dtype.name
    elif isinstance(out_dtype, str):
        out_name = out_dtype
    else:
        out_name = jnp.zeros((), out_dtype).dtype.name
    out_itemsize = _itemsize(out_name)

    vmem_cap, is_v5e, is_v7x = _tpu_config()
    vmem_budget = int(0.875 * vmem_cap)   # leave compiler-internal scratch room

    # Generation-specific row tile; shrink (16-row aligned, bf16 packs 16 rows
    # per packed vreg) for tiny / decode-like M.
    TM = tm if tm is not None else (256 if is_v7x else 512)
    if M < TM:
        TM = max(16, _round_up(M, 16))
    # v5e has no bf16 VPU/EUP path -> keep the GELU epilogue in f32 there.
    gelu_name = "float32" if is_v5e else "bfloat16"
    gelu_itemsize = _itemsize(gelu_name)

    TH, n_h_steps = _choose_th(C, H, TM, vmem_budget, out_itemsize,
                               gelu_itemsize, _BUFFERED_ONE_OK)
    vmem_limit = min(
        _vmem_estimate(C, TH, TM, n_h_steps, out_itemsize, gelu_itemsize,
                       single_buffer_weights=_BUFFERED_ONE_OK),
        vmem_budget,
    )

    x2d = x.reshape(M, C)

    def run(single_buffer):
        return _mlp_pallas(
            x2d, w1_t, b1_2d, w2_t, b2_2d,
            tm=TM, th=TH, out_dtype=out_name, gelu_dtype=gelu_name,
            single_buffer_weights=single_buffer, vmem_limit=int(vmem_limit),
        )

    if _BUFFERED_ONE_OK:
        try:
            out = run(True)
        except Exception:
            # Pallas build without single-buffer support: fall back once.
            _BUFFERED_ONE_OK = False
            out = run(False)
    else:
        out = run(False)

    return out.reshape(B, T, C)


def mlp_reference(x, w1, b1, w2, b2):
    # Pure-JAX f32 reference mirroring the PyTorch forward (torch layouts).
    h = jnp.einsum("btc,hc->bth", x, w1) + b1
    h = _gelu_tanh(h)
    y = jnp.einsum("bth,ch->btc", h, w2) + b2
    return y


if __name__ == "__main__":
    # Small GPT-like config: batch=2, seq=8, n_embd=32  (hidden = 4*32 = 128)
    B, T, C = 2, 8, 32
    H = 4 * C

    key = jax.random.PRNGKey(0)
    kx, k1, k2, k3, k4 = jax.random.split(key, 5)

    x = jax.random.normal(kx, (B, T, C), dtype=jnp.float32)
    # PyTorch nn.Linear parameter shapes: weight (out, in), bias (out,)
    w1 = jax.random.normal(k1, (H, C), dtype=jnp.float32) * 0.02
    b1 = jax.random.normal(k2, (H,), dtype=jnp.float32) * 0.02
    w2 = jax.random.normal(k3, (C, H), dtype=jnp.float32) * 0.02
    b2 = jax.random.normal(k4, (C,), dtype=jnp.float32) * 0.02

    params = prepare_mlp_params(w1, b1, w2, b2)   # one-time transpose + bf16 cast
    y = mlp_forward(x, *params)
    jax.block_until_ready(y)

    y_ref = mlp_reference(x, w1, b1, w2, b2)
    # bf16 MXU inputs / bf16 GELU epilogue with f32 accumulation -> loose tol.
    assert jnp.allclose(y, y_ref, atol=1e-2, rtol=5e-2), "mismatch vs reference"

    print("KERNEL_OK")
</pallas_src>

<mosaic_0001>
module attributes {stable_mosaic.version = 11 : i64} {
  func.func @kernel(%arg0: i32, %arg1: i32, %arg2: memref<16x32xbf16, #tpu.memory_space<vmem>>, %arg3: memref<32x128xbf16, #tpu.memory_space<vmem>>, %arg4: memref<1x128xf32, #tpu.memory_space<vmem>>, %arg5: memref<128x32xbf16, #tpu.memory_space<vmem>>, %arg6: memref<1x32xf32, #tpu.memory_space<vmem>>, %arg7: memref<16x32xf32, #tpu.memory_space<vmem>>) attributes {dimension_semantics = [#tpu.dimension_semantics<parallel>, #tpu.dimension_semantics<arbitrary>], iteration_bounds = array<i64: 1, 1>, scalar_prefetch = 0 : i64, scratch_operands = 0 : i64, tpu.core_type = #tpu.core_type<tc>, window_params = [{transform_indices = @transform_0, window_bounds = array<i64: 16, 32>}, {pipeline_mode = #tpu.pipeline_mode<synchronous>, transform_indices = @transform_1, window_bounds = array<i64: 32, 128>}, {pipeline_mode = #tpu.pipeline_mode<synchronous>, transform_indices = @transform_2, window_bounds = array<i64: 1, 128>}, {pipeline_mode = #tpu.pipeline_mode<synchronous>, transform_indices = @transform_3, window_bounds = array<i64: 128, 32>}, {pipeline_mode = #tpu.pipeline_mode<synchronous>, transform_indices = @transform_4, window_bounds = array<i64: 1, 32>}, {transform_indices = @transform_5, window_bounds = array<i64: 16, 32>}]} {
    %c0 = arith.constant 0 : index
    %c0_0 = arith.constant 0 : index
    %0 = vector.load %arg2[%c0, %c0_0] : memref<16x32xbf16, #tpu.memory_space<vmem>>, vector<16x32xbf16>
    %c0_1 = arith.constant 0 : index
    %c0_2 = arith.constant 0 : index
    %1 = vector.load %arg3[%c0_1, %c0_2] : memref<32x128xbf16, #tpu.memory_space<vmem>>, vector<32x128xbf16>
    %cst = arith.constant dense<0.000000e+00> : vector<16x128xf32>
    %2 = tpu.matmul %0, %1, %cst {dimension_numbers = #tpu.dot_dimension_numbers<[1], [0], [0], [1], [0, 0, 1, 1], [], []>} : vector<16x32xbf16>, vector<32x128xbf16>, vector<16x128xf32> -> vector<16x128xf32>
    %c0_3 = arith.constant 0 : index
    %c0_4 = arith.constant 0 : index
    %3 = vector.load %arg4[%c0_3, %c0_4] : memref<1x128xf32, #tpu.memory_space<vmem>>, vector<1x128xf32>
    %4 = vector.broadcast %3 : vector<1x128xf32> to vector<16x128xf32>
    %5 = arith.addf %2, %4 : vector<16x128xf32>
    %6 = arith.truncf %5 : vector<16x128xf32> to vector<16x128xbf16>
    %cst_5 = arith.constant 5.000000e-01 : bf16
    %7 = vector.broadcast %cst_5 : bf16 to vector<16x128xbf16>
    %8 = arith.mulf %7, %6 : vector<16x128xbf16>
    %cst_6 = arith.constant 4.467770e-02 : bf16
    %9 = vector.broadcast %cst_6 : bf16 to vector<16x128xbf16>
    %10 = arith.mulf %9, %6 : vector<16x128xbf16>
    %11 = arith.mulf %10, %6 : vector<16x128xbf16>
    %12 = arith.mulf %11, %6 : vector<16x128xbf16>
    %13 = arith.addf %6, %12 : vector<16x128xbf16>
    %cst_7 = arith.constant 7.968750e-01 : bf16
    %14 = vector.broadcast %cst_7 : bf16 to vector<16x128xbf16>
    %15 = arith.mulf %14, %13 : vector<16x128xbf16>
    %16 = math.tanh %15 : vector<16x128xbf16>
    %cst_8 = arith.constant 1.000000e+00 : bf16
    %17 = vector.broadcast %cst_8 : bf16 to vector<16x128xbf16>
    %18 = arith.addf %17, %16 : vector<16x128xbf16>
    %19 = arith.mulf %8, %18 : vector<16x128xbf16>
    %c0_9 = arith.constant 0 : index
    %c0_10 = arith.constant 0 : index
    %20 = vector.load %arg5[%c0_9, %c0_10] : memref<128x32xbf16, #tpu.memory_space<vmem>>, vector<128x32xbf16>
    %cst_11 = arith.constant dense<0.000000e+00> : vector<16x32xf32>
    %21 = tpu.matmul %19, %20, %cst_11 {dimension_numbers = #tpu.dot_dimension_numbers<[1], [0], [0], [1], [0, 0, 1, 1], [], []>} : vector<16x128xbf16>, vector<128x32xbf16>, vector<16x32xf32> -> vector<16x32xf32>
    %c0_12 = arith.constant 0 : index
    %c0_13 = arith.constant 0 : index
    %22 = vector.load %arg6[%c0_12, %c0_13] : memref<1x32xf32, #tpu.memory_space<vmem>>, vector<1x32xf32>
    %23 = vector.broadcast %22 : vector<1x32xf32> to vector<16x32xf32>
    %24 = arith.addf %21, %23 : vector<16x32xf32>
    %c0_14 = arith.constant 0 : index
    %c0_15 = arith.constant 0 : index
    %25 = vector.load %arg7[%c0_14, %c0_15] : memref<16x32xf32, #tpu.memory_space<vmem>>, vector<16x32xf32>
    tpu.vector_store %arg7[%c0_14, %c0_15], %24 {strides = array<i32>} : memref<16x32xf32, #tpu.memory_space<vmem>>, vector<16x32xf32>,
    return
  }
  func.func @transform_0(%arg0: i32, %arg1: i32) -> (i32, i32) {
    %c0_i32 = arith.constant 0 : i32
    %c0_i32_0 = arith.constant 0 : i32
    return %arg0, %c0_i32 : i32, i32
  }
  func.func @transform_1(%arg0: i32, %arg1: i32) -> (i32, i32) {
    %c0_i32 = arith.constant 0 : i32
    %c0_i32_0 = arith.constant 0 : i32
    return %c0_i32, %arg1 : i32, i32
  }
  func.func @transform_2(%arg0: i32, %arg1: i32) -> (i32, i32) {
    %c0_i32 = arith.constant 0 : i32
    %c0_i32_0 = arith.constant 0 : i32
    return %c0_i32, %arg1 : i32, i32
  }
  func.func @transform_3(%arg0: i32, %arg1: i32) -> (i32, i32) {
    %c0_i32 = arith.constant 0 : i32
    %c0_i32_0 = arith.constant 0 : i32
    return %arg1, %c0_i32 : i32, i32
  }
  func.func @transform_4(%arg0: i32, %arg1: i32) -> (i32, i32) {
    %c0_i32 = arith.constant 0 : i32
    %c0_i32_0 = arith.constant 0 : i32
    %c0_i32_1 = arith.constant 0 : i32
    return %c0_i32, %c0_i32_0 : i32, i32
  }
  func.func @transform_5(%arg0: i32, %arg1: i32) -> (i32, i32) {
    %c0_i32 = arith.constant 0 : i32
    %c0_i32_0 = arith.constant 0 : i32
    return %arg0, %c0_i32 : i32, i32
  }
}

module attributes {stable_mosaic.version = 11 : i64} {
  func.func @kernel(%arg0: i32, %arg1: i32, %arg2: memref<16x32xbf16, #tpu.memory_space<vmem>>, %arg3: memref<32x128xbf16, #tpu.memory_space<vmem>>, %arg4: memref<1x128xf32, #tpu.memory_space<vmem>>, %arg5: memref<128x32xbf16, #tpu.memory_space<vmem>>, %arg6: memref<1x32xf32, #tpu.memory_space<vmem>>, %arg7: memref<16x32xf32, #tpu.memory_space<vmem>>) attributes {dimension_semantics = [#tpu.dimension_semantics<parallel>, #tpu.dimension_semantics<arbitrary>], iteration_bounds = array<i64: 1, 1>, scalar_prefetch = 0 : i64, scratch_operands = 0 : i64, tpu.core_type = #tpu.core_type<tc>, window_params = [{transform_indices = @transform_0, window_bounds = array<i64: 16, 32>}, {transform_indices = @transform_1, window_bounds = array<i64: 32, 128>}, {transform_indices = @transform_2, window_bounds = array<i64: 1, 128>}, {transform_indices = @transform_3, window_bounds = array<i64: 128, 32>}, {pipeline_mode = #tpu.pipeline_mode<synchronous>, transform_indices = @transform_4, window_bounds = array<i64: 1, 32>}, {transform_indices = @transform_5, window_bounds = array<i64: 16, 32>}]} {
    %c0 = arith.constant 0 : index
    %c0_0 = arith.constant 0 : index
    %0 = vector.load %arg2[%c0, %c0_0] : memref<16x32xbf16, #tpu.memory_space<vmem>>, vector<16x32xbf16>
    %c0_1 = arith.constant 0 : index
    %c0_2 = arith.constant 0 : index
    %1 = vector.load %arg3[%c0_1, %c0_2] : memref<32x128xbf16, #tpu.memory_space<vmem>>, vector<32x128xbf16>
    %cst = arith.constant dense<0.000000e+00> : vector<16x128xf32>
    %2 = tpu.matmul %0, %1, %cst {dimension_numbers = #tpu.dot_dimension_numbers<[1], [0], [0], [1], [0, 0, 1, 1], [], []>} : vector<16x32xbf16>, vector<32x128xbf16>, vector<16x128xf32> -> vector<16x128xf32>
    %c0_3 = arith.constant 0 : index
    %c0_4 = arith.constant 0 : index
    %3 = vector.load %arg4[%c0_3, %c0_4] : memref<1x128xf32, #tpu.memory_space<vmem>>, vector<1x128xf32>
    %4 = vector.broadcast %3 : vector<1x128xf32> to vector<16x128xf32>
    %5 = arith.addf %2, %4 : vector<16x128xf32>
    %6 = arith.truncf %5 : vector<16x128xf32> to vector<16x128xbf16>
    %cst_5 = arith.constant 5.000000e-01 : bf16
    %7 = vector.broadcast %cst_5 : bf16 to vector<16x128xbf16>
    %8 = arith.mulf %7, %6 : vector<16x128xbf16>
    %cst_6 = arith.constant 4.467770e-02 : bf16
    %9 = vector.broadcast %cst_6 : bf16 to vector<16x128xbf16>
    %10 = arith.mulf %9, %6 : vector<16x128xbf16>
    %11 = arith.mulf %10, %6 : vector<16x128xbf16>
    %12 = arith.mulf %11, %6 : vector<16x128xbf16>
    %13 = arith.addf %6, %12 : vector<16x128xbf16>
    %cst_7 = arith.constant 7.968750e-01 : bf16
    %14 = vector.broadcast %cst_7 : bf16 to vector<16x128xbf16>
    %15 = arith.mulf %14, %13 : vector<16x128xbf16>
    %16 = math.tanh %15 : vector<16x128xbf16>
    %cst_8 = arith.constant 1.000000e+00 : bf16
    %17 = vector.broadcast %cst_8 : bf16 to vector<16x128xbf16>
    %18 = arith.addf %17, %16 : vector<16x128xbf16>
    %19 = arith.mulf %8, %18 : vector<16x128xbf16>
    %c0_9 = arith.constant 0 : index
    %c0_10 = arith.constant 0 : index
    %20 = vector.load %arg5[%c0_9, %c0_10] : memref<128x32xbf16, #tpu.memory_space<vmem>>, vector<128x32xbf16>
    %cst_11 = arith.constant dense<0.000000e+00> : vector<16x32xf32>
    %21 = tpu.matmul %19, %20, %cst_11 {dimension_numbers = #tpu.dot_dimension_numbers<[1], [0], [0], [1], [0, 0, 1, 1], [], []>} : vector<16x128xbf16>, vector<128x32xbf16>, vector<16x32xf32> -> vector<16x32xf32>
    %c0_12 = arith.constant 0 : index
    %c0_13 = arith.constant 0 : index
    %22 = vector.load %arg6[%c0_12, %c0_13] : memref<1x32xf32, #tpu.memory_space<vmem>>, vector<1x32xf32>
    %23 = vector.broadcast %22 : vector<1x32xf32> to vector<16x32xf32>
    %24 = arith.addf %21, %23 : vector<16x32xf32>
    %c0_14 = arith.constant 0 : index
    %c0_15 = arith.constant 0 : index
    %25 = vector.load %arg7[%c0_14, %c0_15] : memref<16x32xf32, #tpu.memory_space<vmem>>, vector<16x32xf32>
    tpu.vector_store %arg7[%c0_14, %c0_15], %24 {strides = array<i32>} : memref<16x32xf32, #tpu.memory_space<vmem>>, vector<16x32xf32>,
    return
  }
  func.func @transform_0(%arg0: i32, %arg1: i32) -> (i32, i32) {
    %c0_i32 = arith.constant 0 : i32
    %c0_i32_0 = arith.constant 0 : i32
    return %arg0, %c0_i32 : i32, i32
  }
  func.func @transform_1(%arg0: i32, %arg1: i32) -> (i32, i32) {
    %c0_i32 = arith.constant 0 : i32
    %c0_i32_0 = arith.constant 0 : i32
    return %c0_i32, %arg1 : i32, i32
  }
  func.func @transform_2(%arg0: i32, %arg1: i32) -> (i32, i32) {
    %c0_i32 = arith.constant 0 : i32
    %c0_i32_0 = arith.constant 0 : i32
    return %c0_i32, %arg1 : i32, i32
  }
  func.func @transform_3(%arg0: i32, %arg1: i32) -> (i32, i32) {
    %c0_i32 = arith.constant 0 : i32
    %c0_i32_0 = arith.constant 0 : i32
    return %arg1, %c0_i32 : i32, i32
  }
  func.func @transform_4(%arg0: i32, %arg1: i32) -> (i32, i32) {
    %c0_i32 = arith.constant 0 : i32
    %c0_i32_0 = arith.constant 0 : i32
    %c0_i32_1 = arith.constant 0 : i32
    return %c0_i32, %c0_i32_0 : i32, i32
  }
  func.func @transform_5(%arg0: i32, %arg1: i32) -> (i32, i32) {
    %c0_i32 = arith.constant 0 : i32
    %c0_i32_0 = arith.constant 0 : i32
    return %arg0, %c0_i32 : i32, i32
  }
}

</mosaic_0001>

<llo_original>
// kernel: _mlp_pallas.1
$region0: #{_mlp_pallas.1}
  #allocation0 [shape = 'u32[]', space=smem, size = 0x4, offset = 0x4, fixed_abs, tag = 'smem constant byte address 0x4 - core index']
  #allocation1 [shape = 'u32[144,128]{1,0:T(1,128)}', space=vmem, size = 0x12000, scoped, tag = 'internal scratch']
  %s0 = inlined_call_operand.vmem [shape: bf16[16,32], index: 0, kind: input, shape index: {}]
  %s1 = inlined_call_operand.vmem [shape: bf16[32,128], index: 1, kind: input, shape index: {}]
  %s2 = inlined_call_operand.vmem [shape: f32[1,128], index: 2, kind: input, shape index: {}]
  %s3 = inlined_call_operand.vmem [shape: bf16[128,32], index: 3, kind: input, shape index: {}]
  %s4 = inlined_call_operand.vmem [shape: f32[1,32], index: 4, kind: input, shape index: {}]
  %s5 = inlined_call_operand.hbm [shape: f32[16,32], index: 5, kind: output, shape index: {}]
  %s6 = sld [smem:[#allocation0]]
  $region30: #{_mlp_pallas.1} parent=0
    _
  %s8 = ssub.s32 1, %s6
  %s9 = scalar_select 0, %s8, %s6
  $region1: #{_mlp_pallas.1} parent=0
    #allocation2 [shape = 'u8[8192]{0}', space=vmem, size = 0x2000, scoped, tag = 'output window, operand 0, single buffered']
    #allocation3 [shape = 's32[1]{0}', space=sflag, size = 0x4, scoped, tag = 'scoped memory for _mlp_pallas.1']
    %10 = vsyncpa [#allocation3], 0
    // Predicated region
    $region2: #{_mlp_pallas.1} parent=1 // pred_check
      _
    $region3: #{_mlp_pallas.1} parent=1 // pred_check_branch
      %12 = sbr.rel (0) target = $region5
    $region4: #{_mlp_pallas.1} parent=1 // pred_region
      _
    $region5: #{_mlp_pallas.1} parent=1 // pred_fallthru
      _
    // Predicated region
    $region6: #{_mlp_pallas.1} parent=1 // pred_check
      _
    $region7: #{_mlp_pallas.1} parent=1 // pred_check_branch
      %14 = sbr.rel (0) target = $region9
    $region8: #{_mlp_pallas.1} parent=1 // pred_region
      _
    $region9: #{_mlp_pallas.1} parent=1 // pred_fallthru
      _
    // Predicated region
    $region10: #{_mlp_pallas.1} parent=1 // pred_check
      _
    $region11: #{_mlp_pallas.1} parent=1 // pred_check_branch
      %16 = sbr.rel (0) target = $region13
    $region12: #{_mlp_pallas.1} parent=1 // pred_region
      _
    $region13: #{_mlp_pallas.1} parent=1 // pred_fallthru
      _
    // Predicated region
    $region14: #{_mlp_pallas.1} parent=1 // pred_check
      _
    $region15: #{_mlp_pallas.1} parent=1 // pred_check_branch
      %18 = sbr.rel (0) target = $region17
    $region16: #{_mlp_pallas.1} parent=1 // pred_region
      _
    $region17: #{_mlp_pallas.1} parent=1 // pred_fallthru
      _
    // Predicated region
    $region18: #{_mlp_pallas.1} parent=1 // pred_check
      _
    $region19: #{_mlp_pallas.1} parent=1 // pred_check_branch
      %20 = sbr.rel (0) target = $region21
    $region20: #{_mlp_pallas.1} parent=1 // pred_region
      _
    $region21: #{_mlp_pallas.1} parent=1 // pred_fallthru
      _
    %v26 = vld [vmem:[%s0] sm:$0xf]
    %v27 = vld [vmem:[%s0 + $0x4] sm:$0xf]
    %v28 = vld [vmem:[%s1] sm:$0xf]
    %v29 = vld [vmem:[%s1 + $0x4] sm:$0xf]
    %v30 = vld [vmem:[%s1 + $0x8] sm:$0xf]
    %v31 = vld [vmem:[%s1 + $0xc] sm:$0xf]
    %v32 = vld [vmem:[%s2] sm:$0x1]
    %v34 = vlaneseq
    %v35 = vshrl.u32 %v34, 7
    %v36 = vsub.s32 0, %v35
    %v37 = vrot.slane %v32, %v36
    %v41 = vunpack.c.l.b16 %v26
    %v42 = vunpack.c.l.b16 %v27
    %v43 = vpack.c.b16 %v42, %v41
    %v48 = vunpack.c.l.b16 %v28
    %v49 = vunpack.c.l.b16 %v29
    %v50 = vunpack.c.l.b16 %v30
    %v51 = vunpack.c.l.b16 %v31
    %v52 = vpack.c.b16 %v49, %v48
    %v53 = vpack.c.b16 %v51, %v50
    %vm56 = vcmask 261120
    %v58 = vsel %vm56, %v43, 0
    %60 = vmatprep.subr.bf16.mxu0 0
    %61 = vmatpush1.bf16.msra.mxu0 %v52
    %62 = vmatprep.subr.bf16.mxu0 0
    %63 = vmatpush1.bf16.msra.mxu0 %v53
    %64 = vmatprep.subr.bf16.mxu0 0
    %65 = vmatpush1.bf16.msra.mxu0 0
    %66 = vmatprep.subr.bf16.mxu0 0
    %67 = vmatpush1.bf16.msra.mxu0 0
    %68 = vmatprep.subr.bf16.mxu0 0
    %69 = vmatpush1.bf16.msra.mxu0 0
    %70 = vmatprep.subr.bf16.mxu0 0
    %71 = vmatpush1.bf16.msra.mxu0 0
    %72 = vmatprep.subr.bf16.mxu0 0
    %73 = vmatpush1.bf16.msra.mxu0 0
    %74 = vmatprep.subr.bf16.mxu0 0
    %75 = vmatpush1.bf16.msra.mxu0 0
    %76 = vmatprep.subr.bf16.mxu0 0
    %77 = vmatpush1.bf16.msra.mxu0 0
    %78 = vmatprep.subr.bf16.mxu0 0
    %79 = vmatpush1.bf16.msra.mxu0 0
    %80 = vmatprep.subr.bf16.mxu0 0
    %81 = vmatpush1.bf16.msra.mxu0 0
    %82 = vmatprep.subr.bf16.mxu0 0
    %83 = vmatpush1.bf16.msra.mxu0 0
    %84 = vmatprep.subr.bf16.mxu0 0
    %85 = vmatpush1.bf16.msra.mxu0 0
    %86 = vmatprep.subr.bf16.mxu0 0
    %87 = vmatpush1.bf16.msra.mxu0 0
    %88 = vmatprep.subr.bf16.mxu0 0
    %89 = vmatpush1.bf16.msra.mxu0 0
    %90 = vmatprep.subr.bf16.mxu0 0
    %91 = vmatpush1.bf16.msra.mxu0 0
    %92 = vmatprep.mubr.bf16.mxu0 0
    %93 = vmatmul.mubr.bf16.gmra.mrb[0].mxu0 %v58
    %v94 = vpop.f32.mrb[0].mxu0
    %v95 = vadd.f32 %v37, %v94
    %v96 = vpop.f32.mrb[0].mxu0
    %v97 = vpop.f32.mrb[0].mxu0
    %v98 = vadd.f32 %v37, %v97
    %v99 = vpop.f32.mrb[0].mxu0
    %100 = vdwg.mxu0
    %v101 = vpack.c.bf16 %v98, %v95
    %v102 = vmul.bf16 %v101, 1056980736
    %v103 = vmul.bf16 %v101, 1027030327
    %v104 = vmul.bf16 %v103, %v101
    %v105 = vmul.bf16 %v104, %v101
    %v106 = vadd.bf16 %v101, %v105
    %v107 = vmul.bf16 %v106, 1061961548
    %v108 = vtanh.bf16.pop %v107
    %v109 = vadd.bf16 %v108, 1065369472
    %v110 = vmul.bf16 %v102, %v109
    %v111 = vld [vmem:[%s3] sm:$0xf]
    %v112 = vld [vmem:[%s3 + $0x4] sm:$0xf]
    %v113 = vld [vmem:[%s3 + $0x8] sm:$0xf]
    %v114 = vld [vmem:[%s3 + $0xc] sm:$0xf]
    %v115 = vld [vmem:[%s3 + $0x10] sm:$0xf]
    %v116 = vld [vmem:[%s3 + $0x14] sm:$0xf]
    %v117 = vld [vmem:[%s3 + $0x18] sm:$0xf]
    %v118 = vld [vmem:[%s3 + $0x1c] sm:$0xf]
    %v119 = vld [vmem:[%s3 + $0x20] sm:$0xf]
    %v120 = vld [vmem:[%s3 + $0x24] sm:$0xf]
    %v121 = vld [vmem:[%s3 + $0x28] sm:$0xf]
    %v122 = vld [vmem:[%s3 + $0x2c] sm:$0xf]
    %v123 = vld [vmem:[%s3 + $0x30] sm:$0xf]
    %v124 = vld [vmem:[%s3 + $0x34] sm:$0xf]
    %v125 = vld [vmem:[%s3 + $0x38] sm:$0xf]
    %v126 = vld [vmem:[%s3 + $0x3c] sm:$0xf]
    %v127 = vld [vmem:[%s4] sm:$0x1]
    %v129 = vlaneseq
    %v130 = vshrl.u32 %v129, 7
    %v131 = vsub.s32 0, %v130
    %v132 = vrot.slane %v127, %v131
    %v150 = vunpack.c.l.b16 %v111
    %v151 = vunpack.c.l.b16 %v112
    %v152 = vunpack.c.l.b16 %v113
    %v153 = vunpack.c.l.b16 %v114
    %v154 = vunpack.c.l.b16 %v115
    %v155 = vunpack.c.l.b16 %v116
    %v156 = vunpack.c.l.b16 %v117
    %v157 = vunpack.c.l.b16 %v118
    %v158 = vunpack.c.l.b16 %v119
    %v159 = vunpack.c.l.b16 %v120
    %v160 = vunpack.c.l.b16 %v121
    %v161 = vunpack.c.l.b16 %v122
    %v162 = vunpack.c.l.b16 %v123
    %v163 = vunpack.c.l.b16 %v124
    %v164 = vunpack.c.l.b16 %v125
    %v165 = vunpack.c.l.b16 %v126
    %v166 = vpack.c.b16 %v151, %v150
    %v167 = vpack.c.b16 %v153, %v152
    %v168 = vpack.c.b16 %v155, %v154
    %v169 = vpack.c.b16 %v157, %v156
    %v170 = vpack.c.b16 %v159, %v158
    %v171 = vpack.c.b16 %v161, %v160
    %v172 = vpack.c.b16 %v163, %v162
    %v173 = vpack.c.b16 %v165, %v164
    %182 = vmatprep.subr.bf16.mxu0 0
    %183 = vmatpush1.bf16.msra.mxu0 %v166
    %184 = vmatprep.subr.bf16.mxu0 0
    %185 = vmatpush1.bf16.msra.mxu0 %v167
    %186 = vmatprep.subr.bf16.mxu0 0
    %187 = vmatpush1.bf16.msra.mxu0 %v168
    %188 = vmatprep.subr.bf16.mxu0 0
    %189 = vmatpush1.bf16.msra.mxu0 %v169
    %190 = vmatprep.subr.bf16.mxu0 0
    %191 = vmatpush1.bf16.msra.mxu0 %v170
    %192 = vmatprep.subr.bf16.mxu0 0
    %193 = vmatpush1.bf16.msra.mxu0 %v171
    %194 = vmatprep.subr.bf16.mxu0 0
    %195 = vmatpush1.bf16.msra.mxu0 %v172
    %196 = vmatprep.subr.bf16.mxu0 0
    %197 = vmatpush1.bf16.msra.mxu0 %v173
    %198 = vmatprep.subr.bf16.mxu0 0
    %199 = vmatpush1.bf16.msra.mxu0 0
    %200 = vmatprep.subr.bf16.mxu0 0
    %201 = vmatpush1.bf16.msra.mxu0 0
    %202 = vmatprep.subr.bf16.mxu0 0
    %203 = vmatpush1.bf16.msra.mxu0 0
    %204 = vmatprep.subr.bf16.mxu0 0
    %205 = vmatpush1.bf16.msra.mxu0 0
    %206 = vmatprep.subr.bf16.mxu0 0
    %207 = vmatpush1.bf16.msra.mxu0 0
    %208 = vmatprep.subr.bf16.mxu0 0
    %209 = vmatpush1.bf16.msra.mxu0 0
    %210 = vmatprep.subr.bf16.mxu0 0
    %211 = vmatpush1.bf16.msra.mxu0 0
    %212 = vmatprep.subr.bf16.mxu0 0
    %213 = vmatpush1.bf16.msra.mxu0 0
    %214 = vmatprep.mubr.bf16.mxu0 0
    %215 = vmatmul.mubr.bf16.gmra.mrb[0].mxu0 %v110
    %v216 = vpop.f32.mrb[0].mxu0
    %v217 = vadd.f32 %v132, %v216
    %v218 = vpop.f32.mrb[0].mxu0
    %v219 = vpop.f32.mrb[0].mxu0
    %v220 = vadd.f32 %v132, %v219
    %v221 = vpop.f32.mrb[0].mxu0
    %222 = vdwg.mxu0
    %223 = vst.msk [vmem:[#allocation2] sm:$0xff] %vm56, %v217
    %224 = vst.msk [vmem:[#allocation2 + $0x8] sm:$0xff] %vm56, %v220
    // Predicated region
    $region22: #{_mlp_pallas.1} parent=1 // pred_check
      _
    $region23: #{_mlp_pallas.1} parent=1 // pred_check_branch
      %226 = sbr.rel (0) target = $region25
    $region24: #{_mlp_pallas.1} parent=1 // pred_region
      %s228 = ssub.s32 256, 256
      %229 = vsyncadd [#allocation3], %s228
      %s230 = sshll.u32 [#allocation2], 4
      %s231 = int_to_ptr.vmem [resolvable:$true] %s230
      %236 = dma.vmem_to_hbm [thread:$0]  %s231, 256, %s5, [#allocation3], 128, 128, 8
    $region25: #{_mlp_pallas.1} parent=1 // pred_fallthru
      _
    // Predicated region
    $region26: #{_mlp_pallas.1} parent=1 // pred_check
      _
    $region27: #{_mlp_pallas.1} parent=1 // pred_check_branch
      %238 = sbr.rel (0) target = $region29
    $region28: #{_mlp_pallas.1} parent=1 // pred_region
      %239 = dma.done [#allocation3], 256
    $region29: #{_mlp_pallas.1} parent=1 // pred_fallthru
      _
    %240 = vsyncpa [#allocation3], 1

// kernel: _mlp_pallas.1
$region0: #{_mlp_pallas.1}
  #allocation0 [shape = 'u32[]', space=smem, size = 0x4, offset = 0x4, fixed_abs, tag = 'smem constant byte address 0x4 - core index']
  #allocation1 [shape = 'u32[144,128]{1,0:T(1,128)}', space=vmem, size = 0x12000, scoped, tag = 'internal scratch']
  %s0 = inlined_call_operand.vmem [shape: bf16[16,32], index: 0, kind: input, shape index: {}]
  %s1 = inlined_call_operand.vmem [shape: bf16[32,128], index: 1, kind: input, shape index: {}]
  %s2 = inlined_call_operand.vmem [shape: f32[1,128], index: 2, kind: input, shape index: {}]
  %s3 = inlined_call_operand.vmem [shape: bf16[128,32], index: 3, kind: input, shape index: {}]
  %s4 = inlined_call_operand.vmem [shape: f32[1,32], index: 4, kind: input, shape index: {}]
  %s5 = inlined_call_operand.hbm [shape: f32[16,32], index: 5, kind: output, shape index: {}]
  %s6 = sld [smem:[#allocation0]]
  $region30: #{_mlp_pallas.1} parent=0
    _
  %s8 = ssub.s32 1, %s6
  %s9 = scalar_select 0, %s8, %s6
  $region1: #{_mlp_pallas.1} parent=0
    #allocation2 [shape = 'u8[8192]{0}', space=vmem, size = 0x2000, scoped, tag = 'output window, operand 0, single buffered']
    #allocation3 [shape = 's32[1]{0}', space=sflag, size = 0x4, scoped, tag = 'scoped memory for _mlp_pallas.1']
    %10 = vsyncpa [#allocation3], 0
    // Predicated region
    $region2: #{_mlp_pallas.1} parent=1 // pred_check
      _
    $region3: #{_mlp_pallas.1} parent=1 // pred_check_branch
      %12 = sbr.rel (0) target = $region5
    $region4: #{_mlp_pallas.1} parent=1 // pred_region
      _
    $region5: #{_mlp_pallas.1} parent=1 // pred_fallthru
      _
    // Predicated region
    $region6: #{_mlp_pallas.1} parent=1 // pred_check
      _
    $region7: #{_mlp_pallas.1} parent=1 // pred_check_branch
      %14 = sbr.rel (0) target = $region9
    $region8: #{_mlp_pallas.1} parent=1 // pred_region
      _
    $region9: #{_mlp_pallas.1} parent=1 // pred_fallthru
      _
    // Predicated region
    $region10: #{_mlp_pallas.1} parent=1 // pred_check
      _
    $region11: #{_mlp_pallas.1} parent=1 // pred_check_branch
      %16 = sbr.rel (0) target = $region13
    $region12: #{_mlp_pallas.1} parent=1 // pred_region
      _
    $region13: #{_mlp_pallas.1} parent=1 // pred_fallthru
      _
    // Predicated region
    $region14: #{_mlp_pallas.1} parent=1 // pred_check
      _
    $region15: #{_mlp_pallas.1} parent=1 // pred_check_branch
      %18 = sbr.rel (0) target = $region17
    $region16: #{_mlp_pallas.1} parent=1 // pred_region
      _
    $region17: #{_mlp_pallas.1} parent=1 // pred_fallthru
      _
    // Predicated region
    $region18: #{_mlp_pallas.1} parent=1 // pred_check
      _
    $region19: #{_mlp_pallas.1} parent=1 // pred_check_branch
      %20 = sbr.rel (0) target = $region21
    $region20: #{_mlp_pallas.1} parent=1 // pred_region
      _
    $region21: #{_mlp_pallas.1} parent=1 // pred_fallthru
      _
    %v26 = vld [vmem:[%s0] sm:$0xf]
    %v27 = vld [vmem:[%s0 + $0x4] sm:$0xf]
    %v28 = vld [vmem:[%s1] sm:$0xf]
    %v29 = vld [vmem:[%s1 + $0x4] sm:$0xf]
    %v30 = vld [vmem:[%s1 + $0x8] sm:$0xf]
    %v31 = vld [vmem:[%s1 + $0xc] sm:$0xf]
    %v32 = vld [vmem:[%s2] sm:$0x1]
    %v34 = vlaneseq
    %v35 = vshrl.u32 %v34, 7
    %v36 = vsub.s32 0, %v35
    %v37 = vrot.slane %v32, %v36
    %v41 = vunpack.c.l.b16 %v26
    %v42 = vunpack.c.l.b16 %v27
    %v43 = vpack.c.b16 %v42, %v41
    %v48 = vunpack.c.l.b16 %v28
    %v49 = vunpack.c.l.b16 %v29
    %v50 = vunpack.c.l.b16 %v30
    %v51 = vunpack.c.l.b16 %v31
    %v52 = vpack.c.b16 %v49, %v48
    %v53 = vpack.c.b16 %v51, %v50
    %vm56 = vcmask 261120
    %v58 = vsel %vm56, %v43, 0
    %60 = vmatprep.subr.bf16.mxu0 0
    %61 = vmatpush1.bf16.msra.mxu0 %v52
    %62 = vmatprep.subr.bf16.mxu0 0
    %63 = vmatpush1.bf16.msra.mxu0 %v53
    %64 = vmatprep.subr.bf16.mxu0 0
    %65 = vmatpush1.bf16.msra.mxu0 0
    %66 = vmatprep.subr.bf16.mxu0 0
    %67 = vmatpush1.bf16.msra.mxu0 0
    %68 = vmatprep.subr.bf16.mxu0 0
    %69 = vmatpush1.bf16.msra.mxu0 0
    %70 = vmatprep.subr.bf16.mxu0 0
    %71 = vmatpush1.bf16.msra.mxu0 0
    %72 = vmatprep.subr.bf16.mxu0 0
    %73 = vmatpush1.bf16.msra.mxu0 0
    %74 = vmatprep.subr.bf16.mxu0 0
    %75 = vmatpush1.bf16.msra.mxu0 0
    %76 = vmatprep.subr.bf16.mxu0 0
    %77 = vmatpush1.bf16.msra.mxu0 0
    %78 = vmatprep.subr.bf16.mxu0 0
    %79 = vmatpush1.bf16.msra.mxu0 0
    %80 = vmatprep.subr.bf16.mxu0 0
    %81 = vmatpush1.bf16.msra.mxu0 0
    %82 = vmatprep.subr.bf16.mxu0 0
    %83 = vmatpush1.bf16.msra.mxu0 0
    %84 = vmatprep.subr.bf16.mxu0 0
    %85 = vmatpush1.bf16.msra.mxu0 0
    %86 = vmatprep.subr.bf16.mxu0 0
    %87 = vmatpush1.bf16.msra.mxu0 0
    %88 = vmatprep.subr.bf16.mxu0 0
    %89 = vmatpush1.bf16.msra.mxu0 0
    %90 = vmatprep.subr.bf16.mxu0 0
    %91 = vmatpush1.bf16.msra.mxu0 0
    %92 = vmatprep.mubr.bf16.mxu0 0
    %93 = vmatmul.mubr.bf16.gmra.mrb[0].mxu0 %v58
    %v94 = vpop.f32.mrb[0].mxu0
    %v95 = vadd.f32 %v37, %v94
    %v96 = vpop.f32.mrb[0].mxu0
    %v97 = vpop.f32.mrb[0].mxu0
    %v98 = vadd.f32 %v37, %v97
    %v99 = vpop.f32.mrb[0].mxu0
    %100 = vdwg.mxu0
    %v101 = vpack.c.bf16 %v98, %v95
    %v102 = vmul.bf16 %v101, 1056980736
    %v103 = vmul.bf16 %v101, 1027030327
    %v104 = vmul.bf16 %v103, %v101
    %v105 = vmul.bf16 %v104, %v101
    %v106 = vadd.bf16 %v101, %v105
    %v107 = vmul.bf16 %v106, 1061961548
    %v108 = vtanh.bf16.pop %v107
    %v109 = vadd.bf16 %v108, 1065369472
    %v110 = vmul.bf16 %v102, %v109
    %v111 = vld [vmem:[%s3] sm:$0xf]
    %v112 = vld [vmem:[%s3 + $0x4] sm:$0xf]
    %v113 = vld [vmem:[%s3 + $0x8] sm:$0xf]
    %v114 = vld [vmem:[%s3 + $0xc] sm:$0xf]
    %v115 = vld [vmem:[%s3 + $0x10] sm:$0xf]
    %v116 = vld [vmem:[%s3 + $0x14] sm:$0xf]
    %v117 = vld [vmem:[%s3 + $0x18] sm:$0xf]
    %v118 = vld [vmem:[%s3 + $0x1c] sm:$0xf]
    %v119 = vld [vmem:[%s3 + $0x20] sm:$0xf]
    %v120 = vld [vmem:[%s3 + $0x24] sm:$0xf]
    %v121 = vld [vmem:[%s3 + $0x28] sm:$0xf]
    %v122 = vld [vmem:[%s3 + $0x2c] sm:$0xf]
    %v123 = vld [vmem:[%s3 + $0x30] sm:$0xf]
    %v124 = vld [vmem:[%s3 + $0x34] sm:$0xf]
    %v125 = vld [vmem:[%s3 + $0x38] sm:$0xf]
    %v126 = vld [vmem:[%s3 + $0x3c] sm:$0xf]
    %v127 = vld [vmem:[%s4] sm:$0x1]
    %v129 = vlaneseq
    %v130 = vshrl.u32 %v129, 7
    %v131 = vsub.s32 0, %v130
    %v132 = vrot.slane %v127, %v131
    %v150 = vunpack.c.l.b16 %v111
    %v151 = vunpack.c.l.b16 %v112
    %v152 = vunpack.c.l.b16 %v113
    %v153 = vunpack.c.l.b16 %v114
    %v154 = vunpack.c.l.b16 %v115
    %v155 = vunpack.c.l.b16 %v116
    %v156 = vunpack.c.l.b16 %v117
    %v157 = vunpack.c.l.b16 %v118
    %v158 = vunpack.c.l.b16 %v119
    %v159 = vunpack.c.l.b16 %v120
    %v160 = vunpack.c.l.b16 %v121
    %v161 = vunpack.c.l.b16 %v122
    %v162 = vunpack.c.l.b16 %v123
    %v163 = vunpack.c.l.b16 %v124
    %v164 = vunpack.c.l.b16 %v125
    %v165 = vunpack.c.l.b16 %v126
    %v166 = vpack.c.b16 %v151, %v150
    %v167 = vpack.c.b16 %v153, %v152
    %v168 = vpack.c.b16 %v155, %v154
    %v169 = vpack.c.b16 %v157, %v156
    %v170 = vpack.c.b16 %v159, %v158
    %v171 = vpack.c.b16 %v161, %v160
    %v172 = vpack.c.b16 %v163, %v162
    %v173 = vpack.c.b16 %v165, %v164
    %182 = vmatprep.subr.bf16.mxu0 0
    %183 = vmatpush1.bf16.msra.mxu0 %v166
    %184 = vmatprep.subr.bf16.mxu0 0
    %185 = vmatpush1.bf16.msra.mxu0 %v167
    %186 = vmatprep.subr.bf16.mxu0 0
    %187 = vmatpush1.bf16.msra.mxu0 %v168
    %188 = vmatprep.subr.bf16.mxu0 0
    %189 = vmatpush1.bf16.msra.mxu0 %v169
    %190 = vmatprep.subr.bf16.mxu0 0
    %191 = vmatpush1.bf16.msra.mxu0 %v170
    %192 = vmatprep.subr.bf16.mxu0 0
    %193 = vmatpush1.bf16.msra.mxu0 %v171
    %194 = vmatprep.subr.bf16.mxu0 0
    %195 = vmatpush1.bf16.msra.mxu0 %v172
    %196 = vmatprep.subr.bf16.mxu0 0
    %197 = vmatpush1.bf16.msra.mxu0 %v173
    %198 = vmatprep.subr.bf16.mxu0 0
    %199 = vmatpush1.bf16.msra.mxu0 0
    %200 = vmatprep.subr.bf16.mxu0 0
    %201 = vmatpush1.bf16.msra.mxu0 0
    %202 = vmatprep.subr.bf16.mxu0 0
    %203 = vmatpush1.bf16.msra.mxu0 0
    %204 = vmatprep.subr.bf16.mxu0 0
    %205 = vmatpush1.bf16.msra.mxu0 0
    %206 = vmatprep.subr.bf16.mxu0 0
    %207 = vmatpush1.bf16.msra.mxu0 0
    %208 = vmatprep.subr.bf16.mxu0 0
    %209 = vmatpush1.bf16.msra.mxu0 0
    %210 = vmatprep.subr.bf16.mxu0 0
    %211 = vmatpush1.bf16.msra.mxu0 0
    %212 = vmatprep.subr.bf16.mxu0 0
    %213 = vmatpush1.bf16.msra.mxu0 0
    %214 = vmatprep.mubr.bf16.mxu0 0
    %215 = vmatmul.mubr.bf16.gmra.mrb[0].mxu0 %v110
    %v216 = vpop.f32.mrb[0].mxu0
    %v217 = vadd.f32 %v132, %v216
    %v218 = vpop.f32.mrb[0].mxu0
    %v219 = vpop.f32.mrb[0].mxu0
    %v220 = vadd.f32 %v132, %v219
    %v221 = vpop.f32.mrb[0].mxu0
    %222 = vdwg.mxu0
    %223 = vst.msk [vmem:[#allocation2] sm:$0xff] %vm56, %v217
    %224 = vst.msk [vmem:[#allocation2 + $0x8] sm:$0xff] %vm56, %v220
    // Predicated region
    $region22: #{_mlp_pallas.1} parent=1 // pred_check
      _
    $region23: #{_mlp_pallas.1} parent=1 // pred_check_branch
      %226 = sbr.rel (0) target = $region25
    $region24: #{_mlp_pallas.1} parent=1 // pred_region
      %s228 = ssub.s32 256, 256
      %229 = vsyncadd [#allocation3], %s228
      %s230 = sshll.u32 [#allocation2], 4
      %s231 = int_to_ptr.vmem [resolvable:$true] %s230
      %236 = dma.vmem_to_hbm [thread:$0]  %s231, 256, %s5, [#allocation3], 128, 128, 8
    $region25: #{_mlp_pallas.1} parent=1 // pred_fallthru
      _
    // Predicated region
    $region26: #{_mlp_pallas.1} parent=1 // pred_check
      _
    $region27: #{_mlp_pallas.1} parent=1 // pred_check_branch
      %238 = sbr.rel (0) target = $region29
    $region28: #{_mlp_pallas.1} parent=1 // pred_region
      %239 = dma.done [#allocation3], 256
    $region29: #{_mlp_pallas.1} parent=1 // pred_fallthru
      _
    %240 = vsyncpa [#allocation3], 1

</llo_original>
